<compile_context>
chip_gen: v7x
topology: tpu7x:2x2x1
jax: 0.10.0
libtpu: 0.0.40
codegen_flags: <defaults>
</compile_context>

<pallas_src>
from functools import partial

import jax
import jax.numpy as jnp
from jax.experimental import pallas as pl
from jax.experimental.pallas import tpu as pltpu


def _round_up(x: int, m: int) -> int:
    return (x + m - 1) // m * m


def _pick_block_m(B: int) -> int:
    # <=8 rows: minimal sublane-aligned tile (no batch padding for B=8).
    # 9..256 rows: one tile, rounded to 16 (bf16 packs 16 sublanes per vreg).
    # >256 rows: 256-row tiles fill the 256-wide MXU (v6e/v7x) and give a
    #            multi-step "parallel" grid so v7x's 2nd TensorCore gets work.
    if B <= 8:
        return _round_up(B, 8)
    if B <= 256:
        return _round_up(B, 16)
    return 256


def mlp_kernel(x_ref, w1_ref, b1_ref, w2_ref, b2_ref, w3_ref, b3_ref, o_ref):
    # x / weights are bf16; biases and accumulation are f32.
    x = x_ref[...]
    h1 = jnp.dot(x, w1_ref[...], preferred_element_type=jnp.float32) + b1_ref[...]
    h1 = jnp.maximum(h1, 0.0).astype(jnp.bfloat16)
    h2 = jnp.dot(h1, w2_ref[...], preferred_element_type=jnp.float32) + b2_ref[...]
    h2 = jnp.maximum(h2, 0.0).astype(jnp.bfloat16)
    out = jnp.dot(h2, w3_ref[...], preferred_element_type=jnp.float32) + b3_ref[...]
    o_ref[...] = out.astype(o_ref.dtype)


def prepare_params(params):
    """One-time padding + bf16 cast of the weights (hoisted out of the forward).

    Layout: weight lane (last) dims padded to 128; w1's contracting dim stays
    at input_size (sublane-aligned, no padding needed).  Padded regions are
    exactly zero so the real logits are unaffected.
    """
    w1, b1 = params["w1"], params["b1"]
    w2, b2 = params["w2"], params["b2"]
    w3, b3 = params["w3"], params["b3"]

    in_size, hidden = w1.shape
    num_classes = w3.shape[1]
    H = _round_up(hidden, 128)
    C = _round_up(num_classes, 128)

    bf16 = jnp.bfloat16
    prep = {
        "w1": jnp.zeros((in_size, H), bf16).at[:, :hidden].set(w1.astype(bf16)),
        "b1": jnp.zeros((1, H), jnp.float32).at[:, :hidden].set(b1),
        "w2": jnp.zeros((H, H), bf16).at[:hidden, :hidden].set(w2.astype(bf16)),
        "b2": jnp.zeros((1, H), jnp.float32).at[:, :hidden].set(b2),
        "w3": jnp.zeros((H, C), bf16).at[:hidden, :num_classes].set(w3.astype(bf16)),
        "b3": jnp.zeros((1, C), jnp.float32).at[:, :num_classes].set(b3),
    }
    prep = jax.device_put(prep)
    return prep, num_classes


@partial(jax.jit, static_argnames=("num_classes",))
def neural_net_forward(x, prep, *, num_classes):
    """x: (B, input_size) f32. prep: output of prepare_params. Returns (B, num_classes) f32."""
    w1p, b1p = prep["w1"], prep["b1"]
    w2p, b2p = prep["w2"], prep["b2"]
    w3p, b3p = prep["w3"], prep["b3"]

    B, in_size = x.shape
    H = w1p.shape[1]
    C = w3p.shape[1]

    block_m = _pick_block_m(B)
    Bp = _round_up(B, block_m)

    xb = x.astype(jnp.bfloat16)
    if Bp != B:
        xb = jnp.zeros((Bp, in_size), jnp.bfloat16).at[:B].set(xb)

    grid = (Bp // block_m,)
    out_padded = pl.pallas_call(
        mlp_kernel,
        out_shape=jax.ShapeDtypeStruct((Bp, C), jnp.float32),
        grid_spec=pltpu.PrefetchScalarGridSpec(
            num_scalar_prefetch=0,
            grid=grid,
            in_specs=[
                # x tile: last dim equals the full array dim (legal, no 128 pad).
                pl.BlockSpec((block_m, in_size), lambda i: (i, 0)),
                # Weights / biases pinned in VMEM across grid steps.
                pl.BlockSpec((in_size, H), lambda i: (0, 0)),
                pl.BlockSpec((1, H), lambda i: (0, 0)),
                pl.BlockSpec((H, H), lambda i: (0, 0)),
                pl.BlockSpec((1, H), lambda i: (0, 0)),
                pl.BlockSpec((H, C), lambda i: (0, 0)),
                pl.BlockSpec((1, C), lambda i: (0, 0)),
            ],
            out_specs=pl.BlockSpec((block_m, C), lambda i: (i, 0)),
        ),
        compiler_params=pltpu.CompilerParams(
            # Batch axis shards across TensorCores when grid has >= 2 steps
            # (v7x); a single step at tiny batches is overhead-bound anyway.
            dimension_semantics=("parallel",),
        ),
    )(xb, w1p, b1p, w2p, b2p, w3p, b3p)

    # Slice padded rows/classes back off (padded w3/b3 columns are exactly zero).
    return out_padded[:B, :num_classes]


def init_params(key, input_size, hidden_size, num_classes):
    """Deterministic init mimicking PyTorch nn.Linear default (uniform +/- 1/sqrt(fan_in))."""
    ks = jax.random.split(key, 6)

    def linear(kw, kb, fan_in, fan_out):
        bound = 1.0 / jnp.sqrt(jnp.float32(fan_in))
        w = jax.random.uniform(kw, (fan_in, fan_out), jnp.float32, -bound, bound)
        b = jax.random.uniform(kb, (1, fan_out), jnp.float32, -bound, bound)
        return w, b

    w1, b1 = linear(ks[0], ks[1], input_size, hidden_size)
    w2, b2 = linear(ks[2], ks[3], hidden_size, hidden_size)
    w3, b3 = linear(ks[4], ks[5], hidden_size, num_classes)
    return {"w1": w1, "b1": b1, "w2": w2, "b2": b2, "w3": w3, "b3": b3}


if __name__ == "__main__":
    key = jax.random.PRNGKey(0)
    k_x, k_p = jax.random.split(key)

    batch = 8
    input_size = 64      # bag-of-words vocab size in the chatbot
    hidden_size = 32
    num_classes = 16     # number of intent tags

    x = jax.random.normal(k_x, (batch, input_size), dtype=jnp.float32)
    params = init_params(k_p, input_size, hidden_size, num_classes)

    # One-time parameter preparation (padding + bf16 cast hoisted off the hot path).
    prep, n_cls = prepare_params(params)

    out = neural_net_forward(x, prep, num_classes=n_cls)
    jax.block_until_ready(out)
    assert out.shape == (batch, num_classes)

    # Reference 1: same math with bf16 operands / f32 accumulation (tight check).
    cast = lambda a: a.astype(jnp.bfloat16)
    h = jnp.maximum(jnp.dot(cast(x), cast(params["w1"]),
                            preferred_element_type=jnp.float32) + params["b1"], 0.0)
    h = jnp.maximum(jnp.dot(cast(h), cast(params["w2"]),
                            preferred_element_type=jnp.float32) + params["b2"], 0.0)
    ref_bf16 = jnp.dot(cast(h), cast(params["w3"]),
                       preferred_element_type=jnp.float32) + params["b3"]
    assert jnp.allclose(out, ref_bf16, atol=1e-2, rtol=1e-2)

    # Reference 2: full f32 math (loose check; bf16 operands cost ~1e-3 rel error).
    hf = jnp.maximum(x @ params["w1"] + params["b1"], 0.0)
    hf = jnp.maximum(hf @ params["w2"] + params["b2"], 0.0)
    ref_f32 = hf @ params["w3"] + params["b3"]
    assert jnp.allclose(out, ref_f32, atol=5e-2, rtol=5e-2)

    print("KERNEL_OK")
</pallas_src>

<mosaic_0001>
module attributes {stable_mosaic.version = 11 : i64} {
  func.func @mlp_kernel(%arg0: i32, %arg1: memref<8x64xbf16, #tpu.memory_space<vmem>>, %arg2: memref<64x128xbf16, #tpu.memory_space<vmem>>, %arg3: memref<1x128xf32, #tpu.memory_space<vmem>>, %arg4: memref<128x128xbf16, #tpu.memory_space<vmem>>, %arg5: memref<1x128xf32, #tpu.memory_space<vmem>>, %arg6: memref<128x128xbf16, #tpu.memory_space<vmem>>, %arg7: memref<1x128xf32, #tpu.memory_space<vmem>>, %arg8: memref<8x128xf32, #tpu.memory_space<vmem>>) attributes {dimension_semantics = [#tpu.dimension_semantics<parallel>], iteration_bounds = array<i64: 1>, scalar_prefetch = 0 : i64, scratch_operands = 0 : i64, tpu.core_type = #tpu.core_type<tc>, window_params = [{transform_indices = @transform_0, window_bounds = array<i64: 8, 64>}, {pipeline_mode = #tpu.pipeline_mode<synchronous>, transform_indices = @transform_1, window_bounds = array<i64: 64, 128>}, {pipeline_mode = #tpu.pipeline_mode<synchronous>, transform_indices = @transform_2, window_bounds = array<i64: 1, 128>}, {pipeline_mode = #tpu.pipeline_mode<synchronous>, transform_indices = @transform_3, window_bounds = array<i64: 128, 128>}, {pipeline_mode = #tpu.pipeline_mode<synchronous>, transform_indices = @transform_4, window_bounds = array<i64: 1, 128>}, {pipeline_mode = #tpu.pipeline_mode<synchronous>, transform_indices = @transform_5, window_bounds = array<i64: 128, 128>}, {pipeline_mode = #tpu.pipeline_mode<synchronous>, transform_indices = @transform_6, window_bounds = array<i64: 1, 128>}, {transform_indices = @transform_7, window_bounds = array<i64: 8, 128>}]} {
    %c0 = arith.constant 0 : index
    %c0_0 = arith.constant 0 : index
    %0 = vector.load %arg1[%c0, %c0_0] : memref<8x64xbf16, #tpu.memory_space<vmem>>, vector<8x64xbf16>
    %c0_1 = arith.constant 0 : index
    %c0_2 = arith.constant 0 : index
    %1 = vector.load %arg2[%c0_1, %c0_2] : memref<64x128xbf16, #tpu.memory_space<vmem>>, vector<64x128xbf16>
    %cst = arith.constant dense<0.000000e+00> : vector<8x128xf32>
    %2 = tpu.matmul %0, %1, %cst {dimension_numbers = #tpu.dot_dimension_numbers<[1], [0], [0], [1], [0, 0, 1, 1], [], []>} : vector<8x64xbf16>, vector<64x128xbf16>, vector<8x128xf32> -> vector<8x128xf32>
    %c0_3 = arith.constant 0 : index
    %c0_4 = arith.constant 0 : index
    %3 = vector.load %arg3[%c0_3, %c0_4] : memref<1x128xf32, #tpu.memory_space<vmem>>, vector<1x128xf32>
    %4 = vector.broadcast %3 : vector<1x128xf32> to vector<8x128xf32>
    %5 = arith.addf %2, %4 : vector<8x128xf32>
    %cst_5 = arith.constant 0.000000e+00 : f32
    %6 = vector.broadcast %cst_5 : f32 to vector<8x128xf32>
    %7 = arith.maximumf %5, %6 : vector<8x128xf32>
    %8 = arith.truncf %7 : vector<8x128xf32> to vector<8x128xbf16>
    %c0_6 = arith.constant 0 : index
    %c0_7 = arith.constant 0 : index
    %9 = vector.load %arg4[%c0_6, %c0_7] : memref<128x128xbf16, #tpu.memory_space<vmem>>, vector<128x128xbf16>
    %cst_8 = arith.constant dense<0.000000e+00> : vector<8x128xf32>
    %10 = tpu.matmul %8, %9, %cst_8 {dimension_numbers = #tpu.dot_dimension_numbers<[1], [0], [0], [1], [0, 0, 1, 1], [], []>} : vector<8x128xbf16>, vector<128x128xbf16>, vector<8x128xf32> -> vector<8x128xf32>
    %c0_9 = arith.constant 0 : index
    %c0_10 = arith.constant 0 : index
    %11 = vector.load %arg5[%c0_9, %c0_10] : memref<1x128xf32, #tpu.memory_space<vmem>>, vector<1x128xf32>
    %12 = vector.broadcast %11 : vector<1x128xf32> to vector<8x128xf32>
    %13 = arith.addf %10, %12 : vector<8x128xf32>
    %cst_11 = arith.constant 0.000000e+00 : f32
    %14 = vector.broadcast %cst_11 : f32 to vector<8x128xf32>
    %15 = arith.maximumf %13, %14 : vector<8x128xf32>
    %16 = arith.truncf %15 : vector<8x128xf32> to vector<8x128xbf16>
    %c0_12 = arith.constant 0 : index
    %c0_13 = arith.constant 0 : index
    %17 = vector.load %arg6[%c0_12, %c0_13] : memref<128x128xbf16, #tpu.memory_space<vmem>>, vector<128x128xbf16>
    %cst_14 = arith.constant dense<0.000000e+00> : vector<8x128xf32>
    %18 = tpu.matmul %16, %17, %cst_14 {dimension_numbers = #tpu.dot_dimension_numbers<[1], [0], [0], [1], [0, 0, 1, 1], [], []>} : vector<8x128xbf16>, vector<128x128xbf16>, vector<8x128xf32> -> vector<8x128xf32>
    %c0_15 = arith.constant 0 : index
    %c0_16 = arith.constant 0 : index
    %19 = vector.load %arg7[%c0_15, %c0_16] : memref<1x128xf32, #tpu.memory_space<vmem>>, vector<1x128xf32>
    %20 = vector.broadcast %19 : vector<1x128xf32> to vector<8x128xf32>
    %21 = arith.addf %18, %20 : vector<8x128xf32>
    %c0_17 = arith.constant 0 : index
    %c0_18 = arith.constant 0 : index
    %22 = vector.load %arg8[%c0_17, %c0_18] : memref<8x128xf32, #tpu.memory_space<vmem>>, vector<8x128xf32>
    tpu.vector_store %arg8[%c0_17, %c0_18], %21 {strides = array<i32>} : memref<8x128xf32, #tpu.memory_space<vmem>>, vector<8x128xf32>,
    return
  }
  func.func @transform_0(%arg0: i32) -> (i32, i32) {
    %c0_i32 = arith.constant 0 : i32
    %c0_i32_0 = arith.constant 0 : i32
    return %arg0, %c0_i32 : i32, i32
  }
  func.func @transform_1(%arg0: i32) -> (i32, i32) {
    %c0_i32 = arith.constant 0 : i32
    %c0_i32_0 = arith.constant 0 : i32
    %c0_i32_1 = arith.constant 0 : i32
    return %c0_i32, %c0_i32_0 : i32, i32
  }
  func.func @transform_2(%arg0: i32) -> (i32, i32) {
    %c0_i32 = arith.constant 0 : i32
    %c0_i32_0 = arith.constant 0 : i32
    %c0_i32_1 = arith.constant 0 : i32
    return %c0_i32, %c0_i32_0 : i32, i32
  }
  func.func @transform_3(%arg0: i32) -> (i32, i32) {
    %c0_i32 = arith.constant 0 : i32
    %c0_i32_0 = arith.constant 0 : i32
    %c0_i32_1 = arith.constant 0 : i32
    return %c0_i32, %c0_i32_0 : i32, i32
  }
  func.func @transform_4(%arg0: i32) -> (i32, i32) {
    %c0_i32 = arith.constant 0 : i32
    %c0_i32_0 = arith.constant 0 : i32
    %c0_i32_1 = arith.constant 0 : i32
    return %c0_i32, %c0_i32_0 : i32, i32
  }
  func.func @transform_5(%arg0: i32) -> (i32, i32) {
    %c0_i32 = arith.constant 0 : i32
    %c0_i32_0 = arith.constant 0 : i32
    %c0_i32_1 = arith.constant 0 : i32
    return %c0_i32, %c0_i32_0 : i32, i32
  }
  func.func @transform_6(%arg0: i32) -> (i32, i32) {
    %c0_i32 = arith.constant 0 : i32
    %c0_i32_0 = arith.constant 0 : i32
    %c0_i32_1 = arith.constant 0 : i32
    return %c0_i32, %c0_i32_0 : i32, i32
  }
  func.func @transform_7(%arg0: i32) -> (i32, i32) {
    %c0_i32 = arith.constant 0 : i32
    %c0_i32_0 = arith.constant 0 : i32
    return %arg0, %c0_i32 : i32, i32
  }
}

</mosaic_0001>

<llo_original>
// kernel: neural_net_forward.1
$region0: #{neural_net_forward.1}
  #allocation0 [shape = 'u32[]', space=smem, size = 0x4, offset = 0x4, fixed_abs, tag = 'smem constant byte address 0x4 - core index']
  #allocation1 [shape = 'u32[144,128]{1,0:T(1,128)}', space=vmem, size = 0x12000, scoped, tag = 'internal scratch']
  %s0 = inlined_call_operand.vmem [shape: bf16[8,64], index: 0, kind: input, shape index: {}]
  %s1 = inlined_call_operand.hbm [shape: bf16[64,128], index: 1, kind: input, shape index: {}]
  %s2 = inlined_call_operand.vmem [shape: f32[1,128], index: 2, kind: input, shape index: {}]
  %s3 = inlined_call_operand.hbm [shape: bf16[128,128], index: 3, kind: input, shape index: {}]
  %s4 = inlined_call_operand.vmem [shape: f32[1,128], index: 4, kind: input, shape index: {}]
  %s5 = inlined_call_operand.hbm [shape: bf16[128,128], index: 5, kind: input, shape index: {}]
  %s6 = inlined_call_operand.vmem [shape: f32[1,128], index: 6, kind: input, shape index: {}]
  %s7 = inlined_call_operand.hbm [shape: f32[8,128], index: 7, kind: output, shape index: {}]
  %s8 = sld [smem:[#allocation0]]
  $region50: #{neural_net_forward.1} parent=0
    _
  %s10 = ssub.s32 1, %s8
  %s11 = scalar_select 0, %s10, %s8
  $region1: #{neural_net_forward.1} parent=0
    #allocation2 [shape = 'u8[16384]{0}', space=vmem, size = 0x4000, scoped, tag = 'input window, operand 1, single buffered']
    #allocation3 [shape = 's32[1]{0}', space=sflag, size = 0x4, scoped, tag = 'scoped memory for neural_net_forward.1']
    #allocation4 [shape = 's32[1]{0}', space=sflag, size = 0x4, scoped, tag = 'scoped memory for neural_net_forward.1']
    #allocation5 [shape = 'u8[32768]{0}', space=vmem, size = 0x8000, scoped, tag = 'input window, operand 3, single buffered']
    #allocation6 [shape = 's32[1]{0}', space=sflag, size = 0x4, scoped, tag = 'scoped memory for neural_net_forward.1']
    #allocation7 [shape = 'u8[32768]{0}', space=vmem, size = 0x8000, scoped, tag = 'input window, operand 5, single buffered']
    #allocation8 [shape = 'u8[4096]{0}', space=vmem, size = 0x1000, scoped, tag = 'output window, operand 0, single buffered']
    %12 = vsyncpa [#allocation3], 0
    %13 = vsyncpa [#allocation6], 0
    %14 = vsyncpa [#allocation4], 0
    // Predicated region
    $region2: #{neural_net_forward.1} parent=1 // pred_check
      _
    $region3: #{neural_net_forward.1} parent=1 // pred_check_branch
      %16 = sbr.rel (0) target = $region5
    $region4: #{neural_net_forward.1} parent=1 // pred_region
      _
    $region5: #{neural_net_forward.1} parent=1 // pred_fallthru
      _
    // Predicated region
    $region6: #{neural_net_forward.1} parent=1 // pred_check
      _
    $region7: #{neural_net_forward.1} parent=1 // pred_check_branch
      %18 = sbr.rel (0) target = $region9
    $region8: #{neural_net_forward.1} parent=1 // pred_region
      %s20 = ssub.s32 512, 512
      %21 = vsyncadd [#allocation3], %s20
      %s22 = sshll.u32 [#allocation2], 4
      %s23 = int_to_ptr.vmem [resolvable:$true] %s22
      %28 = dma.hbm_to_vmem [thread:$0]  %s1, 512, %s23, [#allocation3], 64, 64, 4
    $region9: #{neural_net_forward.1} parent=1 // pred_fallthru
      _
    // Predicated region
    $region10: #{neural_net_forward.1} parent=1 // pred_check
      _
    $region11: #{neural_net_forward.1} parent=1 // pred_check_branch
      %30 = sbr.rel (0) target = $region13
    $region12: #{neural_net_forward.1} parent=1 // pred_region
      _
    $region13: #{neural_net_forward.1} parent=1 // pred_fallthru
      _
    // Predicated region
    $region14: #{neural_net_forward.1} parent=1 // pred_check
      _
    $region15: #{neural_net_forward.1} parent=1 // pred_check_branch
      %32 = sbr.rel (0) target = $region17
    $region16: #{neural_net_forward.1} parent=1 // pred_region
      %s34 = ssub.s32 1024, 1024
      %35 = vsyncadd [#allocation6], %s34
      %s36 = sshll.u32 [#allocation5], 4
      %s37 = int_to_ptr.vmem [resolvable:$true] %s36
      %42 = dma.hbm_to_vmem [thread:$0]  %s3, 1024, %s37, [#allocation6], 64, 64, 4
    $region17: #{neural_net_forward.1} parent=1 // pred_fallthru
      _
    // Predicated region
    $region18: #{neural_net_forward.1} parent=1 // pred_check
      _
    $region19: #{neural_net_forward.1} parent=1 // pred_check_branch
      %44 = sbr.rel (0) target = $region21
    $region20: #{neural_net_forward.1} parent=1 // pred_region
      _
    $region21: #{neural_net_forward.1} parent=1 // pred_fallthru
      _
    // Predicated region
    $region22: #{neural_net_forward.1} parent=1 // pred_check
      _
    $region23: #{neural_net_forward.1} parent=1 // pred_check_branch
      %46 = sbr.rel (0) target = $region25
    $region24: #{neural_net_forward.1} parent=1 // pred_region
      %s48 = ssub.s32 1024, 1024
      %49 = vsyncadd [#allocation6], %s48
      %s50 = sshll.u32 [#allocation7], 4
      %s51 = int_to_ptr.vmem [resolvable:$true] %s50
      %56 = dma.hbm_to_vmem [thread:$0]  %s5, 1024, %s51, [#allocation6], 64, 64, 4
    $region25: #{neural_net_forward.1} parent=1 // pred_fallthru
      _
    // Predicated region
    $region26: #{neural_net_forward.1} parent=1 // pred_check
      _
    $region27: #{neural_net_forward.1} parent=1 // pred_check_branch
      %58 = sbr.rel (0) target = $region29
    $region28: #{neural_net_forward.1} parent=1 // pred_region
      _
    $region29: #{neural_net_forward.1} parent=1 // pred_fallthru
      _
    // Predicated region
    $region30: #{neural_net_forward.1} parent=1 // pred_check
      _
    $region31: #{neural_net_forward.1} parent=1 // pred_check_branch
      %60 = sbr.rel (0) target = $region33
    $region32: #{neural_net_forward.1} parent=1 // pred_region
      %61 = dma.done [#allocation3], 512
    $region33: #{neural_net_forward.1} parent=1 // pred_fallthru
      _
    // Predicated region
    $region34: #{neural_net_forward.1} parent=1 // pred_check
      _
    $region35: #{neural_net_forward.1} parent=1 // pred_check_branch
      %63 = sbr.rel (0) target = $region37
    $region36: #{neural_net_forward.1} parent=1 // pred_region
      %64 = dma.done [#allocation6], 1024
    $region37: #{neural_net_forward.1} parent=1 // pred_fallthru
      _
    // Predicated region
    $region38: #{neural_net_forward.1} parent=1 // pred_check
      _
    $region39: #{neural_net_forward.1} parent=1 // pred_check_branch
      %66 = sbr.rel (0) target = $region41
    $region40: #{neural_net_forward.1} parent=1 // pred_region
      %67 = dma.done [#allocation6], 1024
    $region41: #{neural_net_forward.1} parent=1 // pred_fallthru
      _
    %v69 = vld [vmem:[%s0] sm:$0xf]
    %v70 = vld [vmem:[#allocation2] sm:$0xf]
    %v71 = vld [vmem:[#allocation2 + $0x4] sm:$0xf]
    %v72 = vld [vmem:[#allocation2 + $0x8] sm:$0xf]
    %v73 = vld [vmem:[#allocation2 + $0xc] sm:$0xf]
    %v74 = vld [vmem:[#allocation2 + $0x10] sm:$0xf]
    %v75 = vld [vmem:[#allocation2 + $0x14] sm:$0xf]
    %v76 = vld [vmem:[#allocation2 + $0x18] sm:$0xf]
    %v77 = vld [vmem:[#allocation2 + $0x1c] sm:$0xf]
    %v78 = vld [vmem:[%s2] sm:$0x1]
    %v80 = vlaneseq
    %v81 = vshrl.u32 %v80, 7
    %v82 = vsub.s32 0, %v81
    %v83 = vrot.slane %v78, %v82
    %v93 = vunpack.c.l.b16 %v70
    %v94 = vunpack.c.l.b16 %v71
    %v95 = vunpack.c.l.b16 %v72
    %v96 = vunpack.c.l.b16 %v73
    %v97 = vunpack.c.l.b16 %v74
    %v98 = vunpack.c.l.b16 %v75
    %v99 = vunpack.c.l.b16 %v76
    %v100 = vunpack.c.l.b16 %v77
    %v101 = vpack.c.b16 %v94, %v93
    %v102 = vpack.c.b16 %v96, %v95
    %v103 = vpack.c.b16 %v98, %v97
    %v104 = vpack.c.b16 %v100, %v99
    %vm109 = vcmask 523264
    %v111 = vsel %vm109, %v69, 0
    %113 = vmatprep.subr.bf16.mxu0 0
    %114 = vmatpush1.bf16.msra.mxu0 %v101
    %115 = vmatprep.subr.bf16.mxu0 0
    %116 = vmatpush1.bf16.msra.mxu0 %v102
    %117 = vmatprep.subr.bf16.mxu0 0
    %118 = vmatpush1.bf16.msra.mxu0 %v103
    %119 = vmatprep.subr.bf16.mxu0 0
    %120 = vmatpush1.bf16.msra.mxu0 %v104
    %121 = vmatprep.subr.bf16.mxu0 0
    %122 = vmatpush1.bf16.msra.mxu0 0
    %123 = vmatprep.subr.bf16.mxu0 0
    %124 = vmatpush1.bf16.msra.mxu0 0
    %125 = vmatprep.subr.bf16.mxu0 0
    %126 = vmatpush1.bf16.msra.mxu0 0
    %127 = vmatprep.subr.bf16.mxu0 0
    %128 = vmatpush1.bf16.msra.mxu0 0
    %129 = vmatprep.subr.bf16.mxu0 0
    %130 = vmatpush1.bf16.msra.mxu0 0
    %131 = vmatprep.subr.bf16.mxu0 0
    %132 = vmatpush1.bf16.msra.mxu0 0
    %133 = vmatprep.subr.bf16.mxu0 0
    %134 = vmatpush1.bf16.msra.mxu0 0
    %135 = vmatprep.subr.bf16.mxu0 0
    %136 = vmatpush1.bf16.msra.mxu0 0
    %137 = vmatprep.subr.bf16.mxu0 0
    %138 = vmatpush1.bf16.msra.mxu0 0
    %139 = vmatprep.subr.bf16.mxu0 0
    %140 = vmatpush1.bf16.msra.mxu0 0
    %141 = vmatprep.subr.bf16.mxu0 0
    %142 = vmatpush1.bf16.msra.mxu0 0
    %143 = vmatprep.subr.bf16.mxu0 0
    %144 = vmatpush1.bf16.msra.mxu0 0
    %145 = vmatprep.mubr.bf16.mxu0 0
    %146 = vmatmul.mubr.bf16.gmra.mrb[0].mxu0 %v111
    %v147 = vpop.f32.mrb[0].mxu0
    %v148 = vadd.f32 %v83, %v147
    %v149 = vpop.f32.mrb[0].mxu0
    %v150 = vpop.f32.mrb[0].mxu0
    %v151 = vpop.f32.mrb[0].mxu0
    %152 = vdwg.mxu0
    %v153 = vmax.f32 %v148, 0.0
    %v154 = vpack.c.bf16 %v153, %v153
    %v155 = vld [vmem:[#allocation5] sm:$0xf]
    %v156 = vld [vmem:[#allocation5 + $0x4] sm:$0xf]
    %v157 = vld [vmem:[#allocation5 + $0x8] sm:$0xf]
    %v158 = vld [vmem:[#allocation5 + $0xc] sm:$0xf]
    %v159 = vld [vmem:[#allocation5 + $0x10] sm:$0xf]
    %v160 = vld [vmem:[#allocation5 + $0x14] sm:$0xf]
    %v161 = vld [vmem:[#allocation5 + $0x18] sm:$0xf]
    %v162 = vld [vmem:[#allocation5 + $0x1c] sm:$0xf]
    %v163 = vld [vmem:[#allocation5 + $0x20] sm:$0xf]
    %v164 = vld [vmem:[#allocation5 + $0x24] sm:$0xf]
    %v165 = vld [vmem:[#allocation5 + $0x28] sm:$0xf]
    %v166 = vld [vmem:[#allocation5 + $0x2c] sm:$0xf]
    %v167 = vld [vmem:[#allocation5 + $0x30] sm:$0xf]
    %v168 = vld [vmem:[#allocation5 + $0x34] sm:$0xf]
    %v169 = vld [vmem:[#allocation5 + $0x38] sm:$0xf]
    %v170 = vld [vmem:[#allocation5 + $0x3c] sm:$0xf]
    %v171 = vld [vmem:[%s4] sm:$0x1]
    %v173 = vlaneseq
    %v174 = vshrl.u32 %v173, 7
    %v175 = vsub.s32 0, %v174
    %v176 = vrot.slane %v171, %v175
    %v194 = vunpack.c.l.b16 %v155
    %v195 = vunpack.c.l.b16 %v156
    %v196 = vunpack.c.l.b16 %v157
    %v197 = vunpack.c.l.b16 %v158
    %v198 = vunpack.c.l.b16 %v159
    %v199 = vunpack.c.l.b16 %v160
    %v200 = vunpack.c.l.b16 %v161
    %v201 = vunpack.c.l.b16 %v162
    %v202 = vunpack.c.l.b16 %v163
    %v203 = vunpack.c.l.b16 %v164
    %v204 = vunpack.c.l.b16 %v165
    %v205 = vunpack.c.l.b16 %v166
    %v206 = vunpack.c.l.b16 %v167
    %v207 = vunpack.c.l.b16 %v168
    %v208 = vunpack.c.l.b16 %v169
    %v209 = vunpack.c.l.b16 %v170
    %v210 = vpack.c.b16 %v195, %v194
    %v211 = vpack.c.b16 %v197, %v196
    %v212 = vpack.c.b16 %v199, %v198
    %v213 = vpack.c.b16 %v201, %v200
    %v214 = vpack.c.b16 %v203, %v202
    %v215 = vpack.c.b16 %v205, %v204
    %v216 = vpack.c.b16 %v207, %v206
    %v217 = vpack.c.b16 %v209, %v208
    %226 = vmatprep.subr.bf16.mxu0 0
    %227 = vmatpush1.bf16.msra.mxu0 %v210
    %228 = vmatprep.subr.bf16.mxu0 0
    %229 = vmatpush1.bf16.msra.mxu0 %v211
    %230 = vmatprep.subr.bf16.mxu0 0
    %231 = vmatpush1.bf16.msra.mxu0 %v212
    %232 = vmatprep.subr.bf16.mxu0 0
    %233 = vmatpush1.bf16.msra.mxu0 %v213
    %234 = vmatprep.subr.bf16.mxu0 0
    %235 = vmatpush1.bf16.msra.mxu0 %v214
    %236 = vmatprep.subr.bf16.mxu0 0
    %237 = vmatpush1.bf16.msra.mxu0 %v215
    %238 = vmatprep.subr.bf16.mxu0 0
    %239 = vmatpush1.bf16.msra.mxu0 %v216
    %240 = vmatprep.subr.bf16.mxu0 0
    %241 = vmatpush1.bf16.msra.mxu0 %v217
    %242 = vmatprep.subr.bf16.mxu0 0
    %243 = vmatpush1.bf16.msra.mxu0 0
    %244 = vmatprep.subr.bf16.mxu0 0
    %245 = vmatpush1.bf16.msra.mxu0 0
    %246 = vmatprep.subr.bf16.mxu0 0
    %247 = vmatpush1.bf16.msra.mxu0 0
    %248 = vmatprep.subr.bf16.mxu0 0
    %249 = vmatpush1.bf16.msra.mxu0 0
    %250 = vmatprep.subr.bf16.mxu0 0
    %251 = vmatpush1.bf16.msra.mxu0 0
    %252 = vmatprep.subr.bf16.mxu0 0
    %253 = vmatpush1.bf16.msra.mxu0 0
    %254 = vmatprep.subr.bf16.mxu0 0
    %255 = vmatpush1.bf16.msra.mxu0 0
    %256 = vmatprep.subr.bf16.mxu0 0
    %257 = vmatpush1.bf16.msra.mxu0 0
    %258 = vmatprep.mubr.bf16.mxu0 0
    %259 = vmatmul.mubr.bf16.gmra.mrb[0].mxu0 %v154
    %v260 = vpop.f32.mrb[0].mxu0
    %v261 = vadd.f32 %v176, %v260
    %v262 = vpop.f32.mrb[0].mxu0
    %v263 = vpop.f32.mrb[0].mxu0
    %v264 = vpop.f32.mrb[0].mxu0
    %265 = vdwg.mxu0
    %v266 = vmax.f32 %v261, 0.0
    %v267 = vpack.c.bf16 %v266, %v266
    %v268 = vld [vmem:[#allocation7] sm:$0xf]
    %v269 = vld [vmem:[#allocation7 + $0x4] sm:$0xf]
    %v270 = vld [vmem:[#allocation7 + $0x8] sm:$0xf]
    %v271 = vld [vmem:[#allocation7 + $0xc] sm:$0xf]
    %v272 = vld [vmem:[#allocation7 + $0x10] sm:$0xf]
    %v273 = vld [vmem:[#allocation7 + $0x14] sm:$0xf]
    %v274 = vld [vmem:[#allocation7 + $0x18] sm:$0xf]
    %v275 = vld [vmem:[#allocation7 + $0x1c] sm:$0xf]
    %v276 = vld [vmem:[#allocation7 + $0x20] sm:$0xf]
    %v277 = vld [vmem:[#allocation7 + $0x24] sm:$0xf]
    %v278 = vld [vmem:[#allocation7 + $0x28] sm:$0xf]
    %v279 = vld [vmem:[#allocation7 + $0x2c] sm:$0xf]
    %v280 = vld [vmem:[#allocation7 + $0x30] sm:$0xf]
    %v281 = vld [vmem:[#allocation7 + $0x34] sm:$0xf]
    %v282 = vld [vmem:[#allocation7 + $0x38] sm:$0xf]
    %v283 = vld [vmem:[#allocation7 + $0x3c] sm:$0xf]
    %v284 = vld [vmem:[%s6] sm:$0x1]
    %v286 = vlaneseq
    %v287 = vshrl.u32 %v286, 7
    %v288 = vsub.s32 0, %v287
    %v289 = vrot.slane %v284, %v288
    %v307 = vunpack.c.l.b16 %v268
    %v308 = vunpack.c.l.b16 %v269
    %v309 = vunpack.c.l.b16 %v270
    %v310 = vunpack.c.l.b16 %v271
    %v311 = vunpack.c.l.b16 %v272
    %v312 = vunpack.c.l.b16 %v273
    %v313 = vunpack.c.l.b16 %v274
    %v314 = vunpack.c.l.b16 %v275
    %v315 = vunpack.c.l.b16 %v276
    %v316 = vunpack.c.l.b16 %v277
    %v317 = vunpack.c.l.b16 %v278
    %v318 = vunpack.c.l.b16 %v279
    %v319 = vunpack.c.l.b16 %v280
    %v320 = vunpack.c.l.b16 %v281
    %v321 = vunpack.c.l.b16 %v282
    %v322 = vunpack.c.l.b16 %v283
    %v323 = vpack.c.b16 %v308, %v307
    %v324 = vpack.c.b16 %v310, %v309
    %v325 = vpack.c.b16 %v312, %v311
    %v326 = vpack.c.b16 %v314, %v313
    %v327 = vpack.c.b16 %v316, %v315
    %v328 = vpack.c.b16 %v318, %v317
    %v329 = vpack.c.b16 %v320, %v319
    %v330 = vpack.c.b16 %v322, %v321
    %339 = vmatprep.subr.bf16.mxu0 0
    %340 = vmatpush1.bf16.msra.mxu0 %v323
    %341 = vmatprep.subr.bf16.mxu0 0
    %342 = vmatpush1.bf16.msra.mxu0 %v324
    %343 = vmatprep.subr.bf16.mxu0 0
    %344 = vmatpush1.bf16.msra.mxu0 %v325
    %345 = vmatprep.subr.bf16.mxu0 0
    %346 = vmatpush1.bf16.msra.mxu0 %v326
    %347 = vmatprep.subr.bf16.mxu0 0
    %348 = vmatpush1.bf16.msra.mxu0 %v327
    %349 = vmatprep.subr.bf16.mxu0 0
    %350 = vmatpush1.bf16.msra.mxu0 %v328
    %351 = vmatprep.subr.bf16.mxu0 0
    %352 = vmatpush1.bf16.msra.mxu0 %v329
    %353 = vmatprep.subr.bf16.mxu0 0
    %354 = vmatpush1.bf16.msra.mxu0 %v330
    %355 = vmatprep.subr.bf16.mxu0 0
    %356 = vmatpush1.bf16.msra.mxu0 0
    %357 = vmatprep.subr.bf16.mxu0 0
    %358 = vmatpush1.bf16.msra.mxu0 0
    %359 = vmatprep.subr.bf16.mxu0 0
    %360 = vmatpush1.bf16.msra.mxu0 0
    %361 = vmatprep.subr.bf16.mxu0 0
    %362 = vmatpush1.bf16.msra.mxu0 0
    %363 = vmatprep.subr.bf16.mxu0 0
    %364 = vmatpush1.bf16.msra.mxu0 0
    %365 = vmatprep.subr.bf16.mxu0 0
    %366 = vmatpush1.bf16.msra.mxu0 0
    %367 = vmatprep.subr.bf16.mxu0 0
    %368 = vmatpush1.bf16.msra.mxu0 0
    %369 = vmatprep.subr.bf16.mxu0 0
    %370 = vmatpush1.bf16.msra.mxu0 0
    %371 = vmatprep.mubr.bf16.mxu0 0
    %372 = vmatmul.mubr.bf16.gmra.mrb[0].mxu0 %v267
    %v373 = vpop.f32.mrb[0].mxu0
    %v374 = vadd.f32 %v289, %v373
    %v375 = vpop.f32.mrb[0].mxu0
    %v376 = vpop.f32.mrb[0].mxu0
    %v377 = vpop.f32.mrb[0].mxu0
    %378 = vdwg.mxu0
    %379 = vst [vmem:[#allocation8] sm:$0xff] %v374
    // Predicated region
    $region42: #{neural_net_forward.1} parent=1 // pred_check
      _
    $region43: #{neural_net_forward.1} parent=1 // pred_check_branch
      %381 = sbr.rel (0) target = $region45
    $region44: #{neural_net_forward.1} parent=1 // pred_region
      %s383 = ssub.s32 128, 128
      %384 = vsyncadd [#allocation4], %s383
      %s386 = sshll.u32 [#allocation8], 4
      %s387 = int_to_ptr.vmem [resolvable:$true] %s386
      %389 = dma.vmem_to_hbm [thread:$0]  %s387, 128, %s7, [#allocation4]
    $region45: #{neural_net_forward.1} parent=1 // pred_fallthru
      _
    // Predicated region
    $region46: #{neural_net_forward.1} parent=1 // pred_check
      _
    $region47: #{neural_net_forward.1} parent=1 // pred_check_branch
      %391 = sbr.rel (0) target = $region49
    $region48: #{neural_net_forward.1} parent=1 // pred_region
      %392 = dma.done [#allocation4], 128
    $region49: #{neural_net_forward.1} parent=1 // pred_fallthru
      _
    %393 = vsyncpa [#allocation3], 1
    %394 = vsyncpa [#allocation6], 1
    %395 = vsyncpa [#allocation4], 1

</llo_original>
